<compile_context>
chip_gen: v5e
topology: v5e:2x2
jax: 0.10.0
libtpu: 0.0.40
codegen_flags: <defaults>
</compile_context>

<pallas_src>
import jax
import jax.numpy as jnp
from jax.experimental import pallas as pl
from jax.experimental.pallas import tpu as pltpu

LN_EPS = 1e-5  # torch nn.LayerNorm default


# ----------------------------- in-kernel math ------------------------------

def _gelu(x):
    # tanh-approximate GELU (EUP tanh slot); torch nn.GELU() is exact erf.
    c = 0.7978845608028654  # sqrt(2/pi)
    return 0.5 * x * (1.0 + jnp.tanh(c * (x + 0.044715 * x * x * x)))


def _layernorm_lastdim(x, g, b):
    mu = jnp.mean(x, axis=-1, keepdims=True)
    var = jnp.mean((x - mu) ** 2, axis=-1, keepdims=True)
    return (x - mu) * jax.lax.rsqrt(var + LN_EPS) * g + b


# ------------------------------ tiling helpers ------------------------------

def _vmem_capacity():
    """Physical per-core VMEM; conservative 64 MiB fallback (works on every gen)."""
    try:
        cap = int(pltpu.get_tpu_info().vmem_capacity_bytes)
        return max(32 << 20, min(cap, 128 << 20))
    except Exception:
        return 64 << 20


def _vmem_limit(block_bytes, cap):
    # actual (double-buffered) footprint + compiler-scratch headroom,
    # always leaving >= 16 MiB of physical VMEM free.
    want = int(block_bytes) + (16 << 20)
    return int(max(16 << 20, min(want, cap - (16 << 20))))


def _row_tile(m, target=128):
    if m <= target:
        return m
    t = target
    while t >= 8:
        if m % t == 0:
            return t
        t //= 2
    # awkward M: keep all rows in one block (avoids the tm=8 MXU-row cliff).
    return m


def _col_tile(n, k, w_itemsize, cap):
    """Largest power-of-two column tile whose double-buffered (K, tn) weight
    stream fits a third of VMEM.  Big tiles on v5e/v6e (128 MiB), smaller on v7x."""
    if n <= 256:
        return n
    budget = cap // 3
    t = 2048
    while t >= 128:
        if n % t == 0 and 2 * k * t * w_itemsize <= budget:
            return t
        t //= 2
    return 128 if n % 128 == 0 else n


# --------------------- fused tiled linear (H-mixer / backbone) ---------------------

def _make_fused_linear_kernel(has_ln, act, has_res):
    def kernel(*refs):
        idx = 0
        x_ref = refs[idx]; idx += 1
        if has_ln:
            g_ref, beta_ref = refs[idx], refs[idx + 1]; idx += 2
        w_ref, b_ref = refs[idx], refs[idx + 1]; idx += 2
        if has_res:
            r_ref = refs[idx]; idx += 1
        o_ref = refs[idx]; idx += 1

        if has_ln:
            xln_ref = refs[idx]; idx += 1  # VMEM scratch (tm, K) bf16

            # LayerNorm + bf16 cast of the resident (tm, K) row tile is computed
            # once per row tile (j == 0) and reused for every column tile j.
            @pl.when(pl.program_id(1) == 0)
            def _():
                xln_ref[...] = _layernorm_lastdim(
                    x_ref[...], g_ref[...], beta_ref[...]).astype(xln_ref.dtype)

            xq = xln_ref[...]
        else:
            xq = x_ref[...]
            if xq.dtype != w_ref.dtype:
                xq = xq.astype(w_ref.dtype)

        # bf16 x bf16 MXU matmul with f32 accumulation.
        y = jnp.dot(xq, w_ref[...], preferred_element_type=jnp.float32)
        y = y + b_ref[...]
        if act == "gelu":
            y = _gelu(y)
        if has_res:
            y = y + r_ref[...].astype(jnp.float32)
        o_ref[...] = y.astype(o_ref.dtype)
    return kernel


def fused_linear(x, w, b, *, ln=None, act=None, residual=None, out_dtype=jnp.float32):
    """y = [gelu](LN?(x) @ w + b) [+ residual];  x:(M,K), w:(K,N) bf16, b:(1,N) f32."""
    M, K = x.shape
    Kw, N = w.shape
    assert Kw == K
    cap = _vmem_capacity()
    tm = _row_tile(M)
    tn = _col_tile(N, K, w.dtype.itemsize, cap)
    assert M % tm == 0 and N % tn == 0
    grid = (M // tm, N // tn)
    has_ln = ln is not None
    has_res = residual is not None
    out_itemsize = jnp.dtype(out_dtype).itemsize

    in_specs = [pl.BlockSpec((tm, K), lambda i, j: (i, 0))]
    args = [x]
    if has_ln:
        g, beta = ln
        in_specs += [pl.BlockSpec((1, K), lambda i, j: (0, 0)),
                     pl.BlockSpec((1, K), lambda i, j: (0, 0))]
        args += [g, beta]
    in_specs += [pl.BlockSpec((K, tn), lambda i, j: (0, j)),
                 pl.BlockSpec((1, tn), lambda i, j: (0, j))]
    args += [w, b]
    if has_res:
        in_specs.append(pl.BlockSpec((tm, tn), lambda i, j: (i, j)))
        args.append(residual)

    block_bytes = (2 * tm * K * x.dtype.itemsize            # x row tile
                   + 2 * K * tn * w.dtype.itemsize          # streamed weight tile
                   + 2 * tn * b.dtype.itemsize              # bias tile
                   + 2 * tm * tn * out_itemsize             # output tile
                   + (2 * tm * tn * residual.dtype.itemsize if has_res else 0)
                   + ((tm * K * w.dtype.itemsize + 4 * K * 4) if has_ln else 0))

    bytes_accessed = (M * K * x.dtype.itemsize
                      + K * N * w.dtype.itemsize
                      + N * b.dtype.itemsize
                      + M * N * out_itemsize
                      + (M * N * residual.dtype.itemsize if has_res else 0)
                      + (2 * K * 4 if has_ln else 0))
    cost = pl.CostEstimate(flops=2 * M * K * N,
                           transcendentals=(M * N if act == "gelu" else 0),
                           bytes_accessed=bytes_accessed)

    scratch = [pltpu.VMEM((tm, K), w.dtype)] if has_ln else []
    # The LN-scratch (written at j == 0) requires the j axis to run sequentially
    # on one core; without LN both axes can be megacore-sharded.
    dims = ("parallel", "arbitrary") if has_ln else ("parallel", "parallel")

    return pl.pallas_call(
        _make_fused_linear_kernel(has_ln, act, has_res),
        grid=grid,
        in_specs=in_specs,
        out_specs=pl.BlockSpec((tm, tn), lambda i, j: (i, j)),
        out_shape=jax.ShapeDtypeStruct((M, N), out_dtype),
        scratch_shapes=scratch,
        compiler_params=pltpu.CompilerParams(
            dimension_semantics=dims,
            vmem_limit_bytes=_vmem_limit(block_bytes, cap)),
        cost_estimate=cost,
    )(*args)


# ------------------------ seq-mixer (mixer_block2) kernel ------------------------

def _seq_mix(w, bias, v):
    # v: (S, H), w: (S_out, S_in) torch layout, bias: (S_out, 1)
    # y[o, h] = sum_s w[o, s] * v[s, h] + bias[o]
    return jnp.sum(w[:, :, None] * v[None, :, :], axis=1) + bias


def _make_seq_mixer_kernel(tb):
    def kernel(x_ref, r2_ref, g_ref, b_ref,
               w1_ref, b1_ref, w2_ref, b2_ref, o_ref):
        # Small resident params, loaded once per grid step.
        g = g_ref[...]; be = b_ref[...]
        w1 = w1_ref[...]; b1 = b1_ref[...]
        w2 = w2_ref[...]; b2 = b2_ref[...]
        # tb batch elements per grid step (statically unrolled) instead of grid=(B,):
        # amortizes the ~0.35us per-step overhead over tb * (S*H) of work.
        for ib in range(tb):
            x = x_ref[ib]                      # (S, H)
            # LayerNorm over S (== torch LayerNorm(seq_len) on the permuted view).
            mu = jnp.mean(x, axis=0, keepdims=True)
            var = jnp.mean((x - mu) ** 2, axis=0, keepdims=True)
            xn = (x - mu) * jax.lax.rsqrt(var + LN_EPS) * g + be   # LN params (S, 1)
            y = _gelu(_seq_mix(w1, b1, xn))
            y = _seq_mix(w2, b2, y)
            o_ref[ib] = (y + r2_ref[ib]).astype(o_ref.dtype)       # + residual2
    return kernel


def seq_mixer(x, r2, p, *, max_tb=8):
    B, S, H = x.shape
    if B <= max_tb:
        tb = B
    else:
        tb = next(t for t in (max_tb, 4, 2, 1) if B % t == 0)
    cap = _vmem_capacity()

    act_spec = pl.BlockSpec((tb, S, H), lambda bb: (bb, 0, 0))

    def rep(arr):
        nd = arr.ndim
        return pl.BlockSpec(arr.shape, lambda bb, _nd=nd: (0,) * _nd)

    block_bytes = 3 * 2 * tb * S * H * 4 + 2 * (2 * S * S + 4 * S) * 4
    return pl.pallas_call(
        _make_seq_mixer_kernel(tb),
        grid=(B // tb,),
        in_specs=[act_spec, act_spec,
                  rep(p["ln2g"]), rep(p["ln2b"]),
                  rep(p["w2a"]), rep(p["b2a"]),
                  rep(p["w2b"]), rep(p["b2b"])],
        out_specs=act_spec,
        out_shape=jax.ShapeDtypeStruct((B, S, H), jnp.float32),
        compiler_params=pltpu.CompilerParams(
            dimension_semantics=("parallel",),
            vmem_limit_bytes=_vmem_limit(block_bytes, cap)),
    )(x, r2, p["ln2g"], p["ln2b"], p["w2a"], p["b2a"], p["w2b"], p["b2b"])


# ------------------------------ clip projector ------------------------------

def clip_proj_kernel(x_ref,
                     g0_ref, be0_ref, w1_ref, b1_ref,
                     g1_ref, be1_ref, w2_ref, b2_ref,
                     g2_ref, be2_ref, w3_ref, b3_ref,
                     o_ref, tmp_ref):
    # LN -> GELU -> Linear, three times; intermediates staged through explicit
    # VMEM scratch (tmp_ref) so Mosaic doesn't spill (tm, C) f32 values from vregs.
    x = _gelu(_layernorm_lastdim(x_ref[...], g0_ref[...], be0_ref[...]))
    tmp_ref[...] = jnp.dot(x.astype(w1_ref.dtype), w1_ref[...],
                           preferred_element_type=jnp.float32) + b1_ref[...]
    x = _gelu(_layernorm_lastdim(tmp_ref[...], g1_ref[...], be1_ref[...]))
    tmp_ref[...] = jnp.dot(x.astype(w2_ref.dtype), w2_ref[...],
                           preferred_element_type=jnp.float32) + b2_ref[...]
    x = _gelu(_layernorm_lastdim(tmp_ref[...], g2_ref[...], be2_ref[...]))
    o_ref[...] = jnp.dot(x.astype(w3_ref.dtype), w3_ref[...],
                         preferred_element_type=jnp.float32) + b3_ref[...]


def clip_proj(x, p):
    M, C = x.shape
    cap = _vmem_capacity()
    tm = _row_tile(M, target=256)   # 256 LHS rows per pass for the 2x256^2 MXUs
    assert M % tm == 0
    row_spec = pl.BlockSpec((tm, C), lambda i: (i, 0))

    def rep(arr):
        nd = arr.ndim
        return pl.BlockSpec(arr.shape, lambda i, _nd=nd: (0,) * _nd)

    order = ["g0", "be0", "w1", "b1", "g1", "be1", "w2", "b2", "g2", "be2", "w3", "b3"]
    w_isz = p["w1"].dtype.itemsize
    # Resident weights are double-buffered by the pipeline (~7 MiB at clip_size=768
    # in bf16): acceptable on every generation, so no pipeline_mode override.
    block_bytes = (2 * tm * C * 4            # x tile
                   + 2 * tm * C * 4          # out tile
                   + tm * C * 4              # intermediate scratch
                   + 2 * 3 * C * C * w_isz   # 3 resident weights, double-buffered
                   + 2 * 9 * C * 4)          # LN params + biases
    cost = pl.CostEstimate(
        flops=3 * 2 * M * C * C,
        transcendentals=3 * M * C,
        bytes_accessed=2 * M * C * 4 + 3 * C * C * w_isz + 9 * C * 4)

    return pl.pallas_call(
        clip_proj_kernel,
        grid=(M // tm,),
        in_specs=[row_spec] + [rep(p[k]) for k in order],
        out_specs=row_spec,
        out_shape=jax.ShapeDtypeStruct((M, C), jnp.float32),
        scratch_shapes=[pltpu.VMEM((tm, C), jnp.float32)],
        compiler_params=pltpu.CompilerParams(
            dimension_semantics=("parallel",),
            vmem_limit_bytes=_vmem_limit(block_bytes, cap)),
        cost_estimate=cost,
    )(x, *[p[k] for k in order])


# ------------------------------- forward pass -------------------------------

def brain_network_forward(x, params):
    """x: (B, S, H) float32 -> (backbone, c, b)  (blurry_recon=False path)."""
    B, S, H = x.shape
    residual1 = x.reshape(B * S, H)      # (B*S, H) f32
    residual2 = x                        # torch's residual2, stored permuted-back
    cur = x
    for p in params["mixer_blocks"]:
        x_flat = cur.reshape(B * S, H)
        # mixer_block1: LN(H) -> Linear(H,H) -> GELU -> (Dropout=id) -> Linear(H,H), +residual1
        h1 = fused_linear(x_flat, p["w1a"], p["b1a"],
                          ln=(p["ln1g"], p["ln1b"]), act="gelu",
                          out_dtype=jnp.bfloat16)                 # bf16 intermediate
        x1 = fused_linear(h1, p["w1b"], p["b1b"], residual=residual1)
        residual1 = x1
        # mixer_block2 along S (torch's permuted view), +residual2
        cur = seq_mixer(x1.reshape(B, S, H), residual2, p)
        residual2 = cur

    x_flat = cur.reshape(B, S * H)
    backbone_flat = fused_linear(x_flat, params["wb"], params["bb"])   # (B, out_dim)
    clip_size = params["clip_size"]
    backbone = backbone_flat.reshape(B, -1, clip_size)                 # (B, N, clip)
    Bn, N, C = backbone.shape
    c = clip_proj(backbone.reshape(Bn * N, C), params["proj"]).reshape(Bn, N, C)
    # TODO(synk): blurry_recon branch (diffusers Decoder / UpDecoderBlock2D, Conv2d
    # b_maps_projector, GroupNorm) not translated; blurry_recon=False, so `b` stays
    # the initialized placeholder [[0.],[0.]] as in the torch forward.
    b = jnp.array([[0.0], [0.0]], dtype=jnp.float32)
    return backbone, c, b


# ------------------------------ parameter init -------------------------------

def init_params(key, H, S, out_dim, clip_size, n_blocks):
    keys = iter(jax.random.split(key, 8 * n_blocks + 16))

    def w(shape, scale=0.02, dtype=jnp.float32):
        return (jax.random.normal(next(keys), shape, jnp.float32) * scale).astype(dtype)

    mixer_blocks = []
    for _ in range(n_blocks):
        mixer_blocks.append(dict(
            ln1g=jnp.ones((1, H), jnp.float32), ln1b=jnp.zeros((1, H), jnp.float32),
            w1a=w((H, H), dtype=jnp.bfloat16), b1a=w((1, H), 0.01),
            w1b=w((H, H), dtype=jnp.bfloat16), b1b=w((1, H), 0.01),
            ln2g=jnp.ones((S, 1), jnp.float32), ln2b=jnp.zeros((S, 1), jnp.float32),
            w2a=w((S, S), 0.5), b2a=w((S, 1), 0.01),
            w2b=w((S, S), 0.5), b2b=w((S, 1), 0.01),
        ))

    proj = dict(
        g0=jnp.ones((1, clip_size), jnp.float32), be0=jnp.zeros((1, clip_size), jnp.float32),
        w1=w((clip_size, clip_size), dtype=jnp.bfloat16), b1=w((1, clip_size), 0.01),
        g1=jnp.ones((1, clip_size), jnp.float32), be1=jnp.zeros((1, clip_size), jnp.float32),
        w2=w((clip_size, clip_size), dtype=jnp.bfloat16), b2=w((1, clip_size), 0.01),
        g2=jnp.ones((1, clip_size), jnp.float32), be2=jnp.zeros((1, clip_size), jnp.float32),
        w3=w((clip_size, clip_size), dtype=jnp.bfloat16), b3=w((1, clip_size), 0.01),
    )

    return dict(
        mixer_blocks=mixer_blocks,
        wb=w((S * H, out_dim), dtype=jnp.bfloat16), bb=w((1, out_dim), 0.01),
        clip_size=clip_size,
        proj=proj,
    )


# ---------------------------------- main -------------------------------------

if __name__ == "__main__":
    # Small analog of the real config (h=4096, seq_len=2, out_dim=clip_size=768).
    B, S, H = 2, 2, 256
    out_dim = clip_size = 128
    n_blocks = 2

    key = jax.random.PRNGKey(0)
    kx, kp = jax.random.split(key)
    x = jax.random.normal(kx, (B, S, H), jnp.float32)
    params = init_params(kp, H, S, out_dim, clip_size, n_blocks)

    backbone, c, b = brain_network_forward(x, params)
    jax.block_until_ready((backbone, c, b))

    assert backbone.shape == (B, out_dim // clip_size, clip_size)
    assert c.shape == backbone.shape
    assert b.shape == (2, 1)
    print("KERNEL_OK")
</pallas_src>

<mosaic_0001>
module attributes {stable_mosaic.version = 11 : i64} {
  func.func @kernel(%arg0: i32, %arg1: i32, %arg2: memref<4x256xf32, #tpu.memory_space<vmem>>, %arg3: memref<1x256xf32, #tpu.memory_space<vmem>>, %arg4: memref<1x256xf32, #tpu.memory_space<vmem>>, %arg5: memref<256x256xbf16, #tpu.memory_space<vmem>>, %arg6: memref<1x256xf32, #tpu.memory_space<vmem>>, %arg7: memref<4x256xbf16, #tpu.memory_space<vmem>>, %arg8: memref<4x256xbf16, #tpu.memory_space<vmem>>) attributes {dimension_semantics = [#tpu.dimension_semantics<parallel>, #tpu.dimension_semantics<arbitrary>], iteration_bounds = array<i64: 1, 1>, scalar_prefetch = 0 : i64, scratch_operands = 1 : i64, tpu.core_type = #tpu.core_type<tc>, window_params = [{transform_indices = @transform_0, window_bounds = array<i64: 4, 256>}, {pipeline_mode = #tpu.pipeline_mode<synchronous>, transform_indices = @transform_1, window_bounds = array<i64: 1, 256>}, {pipeline_mode = #tpu.pipeline_mode<synchronous>, transform_indices = @transform_2, window_bounds = array<i64: 1, 256>}, {transform_indices = @transform_3, window_bounds = array<i64: 256, 256>}, {transform_indices = @transform_4, window_bounds = array<i64: 1, 256>}, {transform_indices = @transform_5, window_bounds = array<i64: 4, 256>}]} {
    %c0_i32 = arith.constant 0 : i32
    %0 = arith.cmpi eq, %arg1, %c0_i32 : i32
    %1 = arith.extui %0 : i1 to i32
    %c0_i32_0 = arith.constant 0 : i32
    %2 = arith.cmpi ne, %1, %c0_i32_0 : i32
    scf.if %2 {
      %c0_12 = arith.constant 0 : index
      %c0_13 = arith.constant 0 : index
      %24 = vector.load %arg2[%c0_12, %c0_13] : memref<4x256xf32, #tpu.memory_space<vmem>>, vector<4x256xf32>
      %c0_14 = arith.constant 0 : index
      %c0_15 = arith.constant 0 : index
      %25 = vector.load %arg3[%c0_14, %c0_15] : memref<1x256xf32, #tpu.memory_space<vmem>>, vector<1x256xf32>
      %c0_16 = arith.constant 0 : index
      %c0_17 = arith.constant 0 : index
      %26 = vector.load %arg4[%c0_16, %c0_17] : memref<1x256xf32, #tpu.memory_space<vmem>>, vector<1x256xf32>
      %cst_18 = arith.constant dense<0.000000e+00> : vector<4xf32>
      %27 = vector.multi_reduction <add>, %24, %cst_18 [1] : vector<4x256xf32> to vector<4xf32>
      %28 = vector.shape_cast %27 : vector<4xf32> to vector<4x1xf32>
      %cst_19 = arith.constant 2.560000e+02 : f32
      %29 = vector.broadcast %cst_19 : f32 to vector<4x1xf32>
      %30 = arith.divf %28, %29 : vector<4x1xf32>
      %31 = vector.broadcast %30 : vector<4x1xf32> to vector<4x256xf32>
      %32 = arith.subf %24, %31 : vector<4x256xf32>
      %33 = arith.mulf %32, %32 : vector<4x256xf32>
      %cst_20 = arith.constant dense<0.000000e+00> : vector<4xf32>
      %34 = vector.multi_reduction <add>, %33, %cst_20 [1] : vector<4x256xf32> to vector<4xf32>
      %35 = vector.shape_cast %34 : vector<4xf32> to vector<4x1xf32>
      %cst_21 = arith.constant 2.560000e+02 : f32
      %36 = vector.broadcast %cst_21 : f32 to vector<4x1xf32>
      %37 = arith.divf %35, %36 : vector<4x1xf32>
      %38 = vector.broadcast %30 : vector<4x1xf32> to vector<4x256xf32>
      %39 = arith.subf %24, %38 : vector<4x256xf32>
      %cst_22 = arith.constant 9.99999974E-6 : f32
      %40 = vector.broadcast %cst_22 : f32 to vector<4x1xf32>
      %41 = arith.addf %37, %40 : vector<4x1xf32>
      %42 = math.rsqrt %41 : vector<4x1xf32>
      %43 = vector.broadcast %42 : vector<4x1xf32> to vector<4x256xf32>
      %44 = arith.mulf %39, %43 : vector<4x256xf32>
      %45 = vector.broadcast %25 : vector<1x256xf32> to vector<4x256xf32>
      %46 = arith.mulf %44, %45 : vector<4x256xf32>
      %47 = vector.broadcast %26 : vector<1x256xf32> to vector<4x256xf32>
      %48 = arith.addf %46, %47 : vector<4x256xf32>
      %49 = arith.truncf %48 : vector<4x256xf32> to vector<4x256xbf16>
      %c0_23 = arith.constant 0 : index
      %c0_24 = arith.constant 0 : index
      %50 = vector.load %arg8[%c0_23, %c0_24] : memref<4x256xbf16, #tpu.memory_space<vmem>>, vector<4x256xbf16>
      tpu.vector_store %arg8[%c0_23, %c0_24], %49 {strides = array<i32>} : memref<4x256xbf16, #tpu.memory_space<vmem>>, vector<4x256xbf16>,
    } else {
    }
    %c0 = arith.constant 0 : index
    %c0_1 = arith.constant 0 : index
    %3 = vector.load %arg8[%c0, %c0_1] : memref<4x256xbf16, #tpu.memory_space<vmem>>, vector<4x256xbf16>
    %c0_2 = arith.constant 0 : index
    %c0_3 = arith.constant 0 : index
    %4 = vector.load %arg5[%c0_2, %c0_3] : memref<256x256xbf16, #tpu.memory_space<vmem>>, vector<256x256xbf16>
    %cst = arith.constant dense<0.000000e+00> : vector<4x256xf32>
    %5 = tpu.matmul %3, %4, %cst {dimension_numbers = #tpu.dot_dimension_numbers<[1], [0], [0], [1], [0, 0, 1, 1], [], []>} : vector<4x256xbf16>, vector<256x256xbf16>, vector<4x256xf32> -> vector<4x256xf32>
    %c0_4 = arith.constant 0 : index
    %c0_5 = arith.constant 0 : index
    %6 = vector.load %arg6[%c0_4, %c0_5] : memref<1x256xf32, #tpu.memory_space<vmem>>, vector<1x256xf32>
    %7 = vector.broadcast %6 : vector<1x256xf32> to vector<4x256xf32>
    %8 = arith.addf %5, %7 : vector<4x256xf32>
    %cst_6 = arith.constant 5.000000e-01 : f32
    %9 = vector.broadcast %cst_6 : f32 to vector<4x256xf32>
    %10 = arith.mulf %9, %8 : vector<4x256xf32>
    %cst_7 = arith.constant 4.471500e-02 : f32
    %11 = vector.broadcast %cst_7 : f32 to vector<4x256xf32>
    %12 = arith.mulf %11, %8 : vector<4x256xf32>
    %13 = arith.mulf %12, %8 : vector<4x256xf32>
    %14 = arith.mulf %13, %8 : vector<4x256xf32>
    %15 = arith.addf %8, %14 : vector<4x256xf32>
    %cst_8 = arith.constant 0.797884583 : f32
    %16 = vector.broadcast %cst_8 : f32 to vector<4x256xf32>
    %17 = arith.mulf %16, %15 : vector<4x256xf32>
    %18 = math.tanh %17 : vector<4x256xf32>
    %cst_9 = arith.constant 1.000000e+00 : f32
    %19 = vector.broadcast %cst_9 : f32 to vector<4x256xf32>
    %20 = arith.addf %19, %18 : vector<4x256xf32>
    %21 = arith.mulf %10, %20 : vector<4x256xf32>
    %22 = arith.truncf %21 : vector<4x256xf32> to vector<4x256xbf16>
    %c0_10 = arith.constant 0 : index
    %c0_11 = arith.constant 0 : index
    %23 = vector.load %arg7[%c0_10, %c0_11] : memref<4x256xbf16, #tpu.memory_space<vmem>>, vector<4x256xbf16>
    tpu.vector_store %arg7[%c0_10, %c0_11], %22 {strides = array<i32>} : memref<4x256xbf16, #tpu.memory_space<vmem>>, vector<4x256xbf16>,
    return
  }
  func.func @transform_0(%arg0: i32, %arg1: i32) -> (i32, i32) {
    %c0_i32 = arith.constant 0 : i32
    %c0_i32_0 = arith.constant 0 : i32
    return %arg0, %c0_i32 : i32, i32
  }
  func.func @transform_1(%arg0: i32, %arg1: i32) -> (i32, i32) {
    %c0_i32 = arith.constant 0 : i32
    %c0_i32_0 = arith.constant 0 : i32
    %c0_i32_1 = arith.constant 0 : i32
    return %c0_i32, %c0_i32_0 : i32, i32
  }
  func.func @transform_2(%arg0: i32, %arg1: i32) -> (i32, i32) {
    %c0_i32 = arith.constant 0 : i32
    %c0_i32_0 = arith.constant 0 : i32
    %c0_i32_1 = arith.constant 0 : i32
    return %c0_i32, %c0_i32_0 : i32, i32
  }
  func.func @transform_3(%arg0: i32, %arg1: i32) -> (i32, i32) {
    %c0_i32 = arith.constant 0 : i32
    %c0_i32_0 = arith.constant 0 : i32
    return %c0_i32, %arg1 : i32, i32
  }
  func.func @transform_4(%arg0: i32, %arg1: i32) -> (i32, i32) {
    %c0_i32 = arith.constant 0 : i32
    %c0_i32_0 = arith.constant 0 : i32
    return %c0_i32, %arg1 : i32, i32
  }
  func.func @transform_5(%arg0: i32, %arg1: i32) -> (i32, i32) {
    %c0_i32 = arith.constant 0 : i32
    return %arg0, %arg1 : i32, i32
  }
}

</mosaic_0001>

<llo_original>
// kernel: tpu_custom_call.1
$region0: #{tpu_custom_call.1}
  #allocation0 [shape = 'u32[]', space=smem, size = 0x4, offset = 0x4, fixed_abs, tag = 'smem constant byte address 0x4 - core index']
  #allocation1 [shape = 'u32[72,128]{1,0:T(1,128)}', space=vmem, size = 0x9000, scoped, tag = 'internal scratch']
  #allocation2 [shape = 'bf16[4,256]{1,0:T(4,128)(2,1)}', space=vmem, size = 0x800, scoped, tag = 'scratch operand']
  %s0 = inlined_call_operand.hbm [shape: f32[4,256], index: 0, kind: input, shape index: {}]
  %s1 = inlined_call_operand.hbm [shape: f32[1,256], index: 1, kind: input, shape index: {}]
  %s2 = inlined_call_operand.hbm [shape: f32[1,256], index: 2, kind: input, shape index: {}]
  %s3 = inlined_call_operand.hbm [shape: bf16[256,256], index: 3, kind: input, shape index: {}]
  %s4 = inlined_call_operand.vmem [shape: f32[1,256], index: 4, kind: input, shape index: {}]
  %s5 = inlined_call_operand.hbm [shape: bf16[4,256], index: 5, kind: output, shape index: {}]
  %s6 = sld [smem:[#allocation0]]
  $region50: #{tpu_custom_call.1} parent=0
    _
  %s8 = ssub.s32 1, %s6
  %s9 = scalar_select 0, %s8, %s6
  $region1: #{tpu_custom_call.1} parent=0
    #allocation3 [shape = 'u8[4096]{0}', space=vmem, size = 0x1000, scoped, tag = 'input window, operand 0, single buffered']
    #allocation4 [shape = 's32[1]{0}', space=sflag, size = 0x4, scoped, tag = 'scoped memory for tpu_custom_call.1']
    #allocation5 [shape = 's32[1]{0}', space=sflag, size = 0x4, scoped, tag = 'scoped memory for tpu_custom_call.1']
    #allocation6 [shape = 'u8[1024]{0}', space=vmem, size = 0x400, scoped, tag = 'input window, operand 1, single buffered']
    #allocation7 [shape = 's32[1]{0}', space=sflag, size = 0x4, scoped, tag = 'scoped memory for tpu_custom_call.1']
    #allocation8 [shape = 'u8[1024]{0}', space=vmem, size = 0x400, scoped, tag = 'input window, operand 2, single buffered']
    #allocation9 [shape = 'u8[131072]{0}', space=vmem, size = 0x20000, scoped, tag = 'input window, operand 3, single buffered']
    #allocation10 [shape = 's32[1]{0}', space=sflag, size = 0x4, scoped, tag = 'scoped memory for tpu_custom_call.1']
    #allocation11 [shape = 'u8[2048]{0}', space=vmem, size = 0x800, scoped, tag = 'output window, operand 0, single buffered']
    %10 = vsyncpa [#allocation4], 0
    %11 = vsyncpa [#allocation7], 0
    %12 = vsyncpa [#allocation10], 0
    %13 = vsyncpa [#allocation5], 0
    // Predicated region
    $region2: #{tpu_custom_call.1} parent=1 // pred_check
      _
    $region3: #{tpu_custom_call.1} parent=1 // pred_check_branch
      %15 = sbr.rel (0) target = $region5
    $region4: #{tpu_custom_call.1} parent=1 // pred_region
      %17 = vsyncadd [#allocation4], 0
      %s19 = sshll.u32 %s0, 4
      %s20 = int_to_ptr.hbm [resolvable:$true] %s19
      %s21 = sshll.u32 [#allocation3], 4
      %s22 = int_to_ptr.vmem [resolvable:$true] %s21
      %24 = dma.hbm_to_vmem [thread:$0]  %s20, 128, %s22, [#allocation4]
    $region5: #{tpu_custom_call.1} parent=1 // pred_fallthru
      _
    // Predicated region
    $region6: #{tpu_custom_call.1} parent=1 // pred_check
      _
    $region7: #{tpu_custom_call.1} parent=1 // pred_check_branch
      %26 = sbr.rel (0) target = $region9
    $region8: #{tpu_custom_call.1} parent=1 // pred_region
      %28 = vsyncadd [#allocation7], 0
      %s30 = sshll.u32 %s1, 4
      %s31 = int_to_ptr.hbm [resolvable:$true] %s30
      %s32 = sshll.u32 [#allocation6], 4
      %s33 = int_to_ptr.vmem [resolvable:$true] %s32
      %35 = dma.hbm_to_vmem [thread:$0]  %s31, 32, %s33, [#allocation7]
    $region9: #{tpu_custom_call.1} parent=1 // pred_fallthru
      _
    // Predicated region
    $region10: #{tpu_custom_call.1} parent=1 // pred_check
      _
    $region11: #{tpu_custom_call.1} parent=1 // pred_check_branch
      %37 = sbr.rel (0) target = $region13
    $region12: #{tpu_custom_call.1} parent=1 // pred_region
      %39 = vsyncadd [#allocation7], 0
      %s41 = sshll.u32 %s2, 4
      %s42 = int_to_ptr.hbm [resolvable:$true] %s41
      %s43 = sshll.u32 [#allocation8], 4
      %s44 = int_to_ptr.vmem [resolvable:$true] %s43
      %46 = dma.hbm_to_vmem [thread:$0]  %s42, 32, %s44, [#allocation7]
    $region13: #{tpu_custom_call.1} parent=1 // pred_fallthru
      _
    // Predicated region
    $region14: #{tpu_custom_call.1} parent=1 // pred_check
      _
    $region15: #{tpu_custom_call.1} parent=1 // pred_check_branch
      %48 = sbr.rel (0) target = $region17
    $region16: #{tpu_custom_call.1} parent=1 // pred_region
      %50 = vsyncadd [#allocation10], 0
      %s51 = sshll.u32 %s3, 4
      %s52 = int_to_ptr.hbm [resolvable:$true] %s51
      %s53 = sshll.u32 [#allocation9], 4
      %s54 = int_to_ptr.vmem [resolvable:$true] %s53
      %59 = dma.hbm_to_vmem [thread:$0]  %s52, 4096, %s54, [#allocation10], 128, 128, 8
    $region17: #{tpu_custom_call.1} parent=1 // pred_fallthru
      _
    // Predicated region
    $region18: #{tpu_custom_call.1} parent=1 // pred_check
      _
    $region19: #{tpu_custom_call.1} parent=1 // pred_check_branch
      %61 = sbr.rel (0) target = $region21
    $region20: #{tpu_custom_call.1} parent=1 // pred_region
      _
    $region21: #{tpu_custom_call.1} parent=1 // pred_fallthru
      _
    // Predicated region
    $region22: #{tpu_custom_call.1} parent=1 // pred_check
      _
    $region23: #{tpu_custom_call.1} parent=1 // pred_check_branch
      %63 = sbr.rel (0) target = $region25
    $region24: #{tpu_custom_call.1} parent=1 // pred_region
      %65 = dma.done [#allocation4], 128
    $region25: #{tpu_custom_call.1} parent=1 // pred_fallthru
      _
    // Predicated region
    $region26: #{tpu_custom_call.1} parent=1 // pred_check
      _
    $region27: #{tpu_custom_call.1} parent=1 // pred_check_branch
      %67 = sbr.rel (0) target = $region29
    $region28: #{tpu_custom_call.1} parent=1 // pred_region
      %69 = dma.done [#allocation7], 32
    $region29: #{tpu_custom_call.1} parent=1 // pred_fallthru
      _
    // Predicated region
    $region30: #{tpu_custom_call.1} parent=1 // pred_check
      _
    $region31: #{tpu_custom_call.1} parent=1 // pred_check_branch
      %71 = sbr.rel (0) target = $region33
    $region32: #{tpu_custom_call.1} parent=1 // pred_region
      %73 = dma.done [#allocation7], 32
    $region33: #{tpu_custom_call.1} parent=1 // pred_fallthru
      _
    // Predicated region
    $region34: #{tpu_custom_call.1} parent=1 // pred_check
      _
    $region35: #{tpu_custom_call.1} parent=1 // pred_check_branch
      %75 = sbr.rel (0) target = $region37
    $region36: #{tpu_custom_call.1} parent=1 // pred_region
      %77 = dma.done [#allocation10], 4096
    $region37: #{tpu_custom_call.1} parent=1 // pred_fallthru
      _
    %p78 = scmp.eq.s32.totalorder 0, 0
    // Predicated region
    $region38: #{tpu_custom_call.1} parent=1 // pred_check
      %p79 = pneg %p78
    $region39: #{tpu_custom_call.1} parent=1 // pred_check_branch
      %81 = sbr.rel (%p79) target = $region41
    $region40: #{tpu_custom_call.1} parent=1 // pred_region
      %v82 = vld [vmem:[#allocation3] sm:$0xff]
      %v83 = vld [vmem:[#allocation6] sm:$0x3]
      %v84 = vld [vmem:[#allocation8] sm:$0x3]
      %86 = vst [vmem:[#allocation1] ss:$2 sm:$0xff] %v82
      %v87 = vld.sshfl [vmem:[#allocation1] sm:$0xff pattern:$0x75316420]
      %v88 = vld.sshfl [vmem:[#allocation1 + $0x8] sm:$0xff pattern:$0x75316420]
      %vm91 = vcmask 1043456
      %v92 = vsel %vm91, %v87, 0.0
      %v93 = vsel %vm91, %v88, 0.0
      %v94 = vadd.f32 %v92, %v93
      %95 = vadd.xlane.f32.xlu0 %v94
      %v96 = vpop.xlane.xlu0 %95
      %v97 = vrcp.pop 256.0
      %v98 = vmul.f32 256.0, %v97
      %v99 = vsub.f32 1.0, %v98
      %v100 = vmul.f32 %v97, %v99
      %v101 = vadd.f32 %v97, %v100
      %vm102 = vweird.f32 %v97
      %v103 = vsel %vm102, %v97, %v101
      %v104 = vmul.f32 %v96, %v103
      %v107 = vunpack.c.l.s4 839922192
      %v108 = vunpack.c.0.s8 %v107
      %v109 = vperm.slane %v104, %v108
      %v111 = vsub.f32 %v82, %v109
      %v112 = vmul.f32 %v111, %v111
      %114 = vst [vmem:[#allocation1] ss:$2 sm:$0xff] %v112
      %v115 = vld.sshfl [vmem:[#allocation1] sm:$0xff pattern:$0x75316420]
      %v116 = vld.sshfl [vmem:[#allocation1 + $0x8] sm:$0xff pattern:$0x75316420]
      %v119 = vsel %vm91, %v115, 0.0
      %v120 = vsel %vm91, %v116, 0.0
      %v121 = vadd.f32 %v119, %v120
      %122 = vadd.xlane.f32.xlu0 %v121
      %v123 = vpop.xlane.xlu0 %122
      %v124 = vmul.f32 %v123, %v103
      %v125 = vadd.f32 %v124, 1e-05
      %v126 = vrsqrt.pop %v125
      %v127 = vmul.f32 %v126, %v125
      %v128 = vmul.f32 %v127, %v126
      %v129 = vmul.f32 0.5, %v128
      %v130 = vsub.f32 1.5, %v129
      %v131 = vmul.f32 %v126, %v130
      %vm132 = vweird.f32 %v125
      %vm133 = vweird.f32 %v126
      %vm134 = vmor %vm132, %vm133
      %v135 = vsel %vm134, %v126, %v131
      %v138 = vunpack.c.l.s4 839922192
      %v139 = vunpack.c.0.s8 %v138
      %v140 = vperm.slane %v135, %v139
      %v142 = vmul.f32 %v111, %v140
      %v144 = vperm.slane %v83, 0
      %v145 = vperm.slane %v83, 1
      %v146 = vrot.slane %v145, 4
      %v147 = vsel %vm91, %v144, %v146
      %v149 = vmul.f32 %v142, %v147
      %v151 = vperm.slane %v84, 0
      %v152 = vperm.slane %v84, 1
      %v153 = vrot.slane %v152, 4
      %v154 = vsel %vm91, %v151, %v153
      %v156 = vadd.f32 %v149, %v154
      %158 = vst [vmem:[#allocation1] ss:$2 sm:$0xff] %v156
      %v159 = vld.sshfl [vmem:[#allocation1] sm:$0xff pattern:$0x75316420]
      %v160 = vld.sshfl [vmem:[#allocation1 + $0x8] sm:$0xff pattern:$0x75316420]
      %v163 = vpack.c.bf16 %v160, %v159
      %v165 = vrot.slane %v163, 2
      %vm166 = vcmask 1041408
      %v169 = vsel %vm166, %v163, %v165
      %171 = vst [vmem:[#allocation2] sm:$0xf] %v169
    $region41: #{tpu_custom_call.1} parent=1 // pred_fallthru
      _
    %v172 = vld [vmem:[#allocation2] sm:$0xf]
    %v173 = vld [vmem:[#allocation9] sm:$0xff]
    %v174 = vld [vmem:[#allocation9 + $0x8] sm:$0xff]
    %v175 = vld [vmem:[#allocation9 + $0x10] sm:$0xff]
    %v176 = vld [vmem:[#allocation9 + $0x18] sm:$0xff]
    %v177 = vld [vmem:[#allocation9 + $0x20] sm:$0xff]
    %v178 = vld [vmem:[#allocation9 + $0x28] sm:$0xff]
    %v179 = vld [vmem:[#allocation9 + $0x30] sm:$0xff]
    %v180 = vld [vmem:[#allocation9 + $0x38] sm:$0xff]
    %v181 = vld [vmem:[#allocation9 + $0x40] sm:$0xff]
    %v182 = vld [vmem:[#allocation9 + $0x48] sm:$0xff]
    %v183 = vld [vmem:[#allocation9 + $0x50] sm:$0xff]
    %v184 = vld [vmem:[#allocation9 + $0x58] sm:$0xff]
    %v185 = vld [vmem:[#allocation9 + $0x60] sm:$0xff]
    %v186 = vld [vmem:[#allocation9 + $0x68] sm:$0xff]
    %v187 = vld [vmem:[#allocation9 + $0x70] sm:$0xff]
    %v188 = vld [vmem:[#allocation9 + $0x78] sm:$0xff]
    %v189 = vld [vmem:[#allocation9 + $0x80] sm:$0xff]
    %v190 = vld [vmem:[#allocation9 + $0x88] sm:$0xff]
    %v191 = vld [vmem:[#allocation9 + $0x90] sm:$0xff]
    %v192 = vld [vmem:[#allocation9 + $0x98] sm:$0xff]
    %v193 = vld [vmem:[#allocation9 + $0xa0] sm:$0xff]
    %v194 = vld [vmem:[#allocation9 + $0xa8] sm:$0xff]
    %v195 = vld [vmem:[#allocation9 + $0xb0] sm:$0xff]
    %v196 = vld [vmem:[#allocation9 + $0xb8] sm:$0xff]
    %v197 = vld [vmem:[#allocation9 + $0xc0] sm:$0xff]
    %v198 = vld [vmem:[#allocation9 + $0xc8] sm:$0xff]
    %v199 = vld [vmem:[#allocation9 + $0xd0] sm:$0xff]
    %v200 = vld [vmem:[#allocation9 + $0xd8] sm:$0xff]
    %v201 = vld [vmem:[#allocation9 + $0xe0] sm:$0xff]
    %v202 = vld [vmem:[#allocation9 + $0xe8] sm:$0xff]
    %v203 = vld [vmem:[#allocation9 + $0xf0] sm:$0xff]
    %v204 = vld [vmem:[#allocation9 + $0xf8] sm:$0xff]
    %v205 = vld [vmem:[%s4] sm:$0x3]
    %v207 = vperm.slane %v205, 0
    %v208 = vperm.slane %v205, 1
    %212 = vst [vmem:[#allocation1] ss:$4 sm:$0xff] %v172
    %v213 = vld.sshfl [vmem:[#allocation1] sm:$0xff pattern:$0x73625140]
    %v214 = vld.sshfl [vmem:[#allocation1 + $0x8] sm:$0xff pattern:$0x73625140]
    %v249 = vunpack.c.l.b16 %v173
    %v250 = vunpack.c.h.b16 %v173
    %v251 = vunpack.c.l.b16 %v174
    %v252 = vunpack.c.h.b16 %v174
    %v253 = vunpack.c.l.b16 %v175
    %v254 = vunpack.c.h.b16 %v175
    %v255 = vunpack.c.l.b16 %v176
    %v256 = vunpack.c.h.b16 %v176
    %v257 = vunpack.c.l.b16 %v177
    %v258 = vunpack.c.h.b16 %v177
    %v259 = vunpack.c.l.b16 %v178
    %v260 = vunpack.c.h.b16 %v178
    %v261 = vunpack.c.l.b16 %v179
    %v262 = vunpack.c.h.b16 %v179
    %v263 = vunpack.c.l.b16 %v180
    %v264 = vunpack.c.h.b16 %v180
    %v265 = vunpack.c.l.b16 %v181
    %v266 = vunpack.c.h.b16 %v181
    %v267 = vunpack.c.l.b16 %v182
    %v268 = vunpack.c.h.b16 %v182
    %v269 = vunpack.c.l.b16 %v183
    %v270 = vunpack.c.h.b16 %v183
    %v271 = vunpack.c.l.b16 %v184
    %v272 = vunpack.c.h.b16 %v184
    %v273 = vunpack.c.l.b16 %v185
    %v274 = vunpack.c.h.b16 %v185
    %v275 = vunpack.c.l.b16 %v186
    %v276 = vunpack.c.h.b16 %v186
    %v277 = vunpack.c.l.b16 %v187
    %v278 = vunpack.c.h.b16 %v187
    %v279 = vunpack.c.l.b16 %v188
    %v280 = vunpack.c.h.b16 %v188
    %v281 = vunpack.c.l.b16 %v189
    %v282 = vunpack.c.h.b16 %v189
    %v283 = vunpack.c.l.b16 %v190
    %v284 = vunpack.c.h.b16 %v190
    %v285 = vunpack.c.l.b16 %v191
    %v286 = vunpack.c.h.b16 %v191
    %v287 = vunpack.c.l.b16 %v192
    %v288 = vunpack.c.h.b16 %v192
    %v289 = vunpack.c.l.b16 %v193
    %v290 = vunpack.c.h.b16 %v193
    %v291 = vunpack.c.l.b16 %v194
    %v292 = vunpack.c.h.b16 %v194
    %v293 = vunpack.c.l.b16 %v195
    %v294 = vunpack.c.h.b16 %v195
    %v295 = vunpack.c.l.b16 %v196
    %v296 = vunpack.c.h.b16 %v196
    %v297 = vunpack.c.l.b16 %v197
    %v298 = vunpack.c.h.b16 %v197
    %v299 = vunpack.c.l.b16 %v198
    %v300 = vunpack.c.h.b16 %v198
    %v301 = vunpack.c.l.b16 %v199
    %v302 = vunpack.c.h.b16 %v199
    %v303 = vunpack.c.l.b16 %v200
    %v304 = vunpack.c.h.b16 %v200
    %v305 = vunpack.c.l.b16 %v201
    %v306 = vunpack.c.h.b16 %v201
    %v307 = vunpack.c.l.b16 %v202
    %v308 = vunpack.c.h.b16 %v202
    %v309 = vunpack.c.l.b16 %v203
    %v310 = vunpack.c.h.b16 %v203
    %v311 = vunpack.c.l.b16 %v204
    %v312 = vunpack.c.h.b16 %v204
    %v313 = vpack.c.b16 %v251, %v249
    %v314 = vpack.c.b16 %v252, %v250
    %v315 = vpack.c.b16 %v255, %v253
    %v316 = vpack.c.b16 %v256, %v254
    %v317 = vpack.c.b16 %v259, %v257
    %v318 = vpack.c.b16 %v260, %v258
    %v319 = vpack.c.b16 %v263, %v261
    %v320 = vpack.c.b16 %v264, %v262
    %v321 = vpack.c.b16 %v267, %v265
    %v322 = vpack.c.b16 %v268, %v266
    %v323 = vpack.c.b16 %v271, %v269
    %v324 = vpack.c.b16 %v272, %v270
    %v325 = vpack.c.b16 %v275, %v273
    %v326 = vpack.c.b16 %v276, %v274
    %v327 = vpack.c.b16 %v279, %v277
    %v328 = vpack.c.b16 %v280, %v278
    %v329 = vpack.c.b16 %v283, %v281
    %v330 = vpack.c.b16 %v284, %v282
    %v331 = vpack.c.b16 %v287, %v285
    %v332 = vpack.c.b16 %v288, %v286
    %v333 = vpack.c.b16 %v291, %v289
    %v334 = vpack.c.b16 %v292, %v290
    %v335 = vpack.c.b16 %v295, %v293
    %v336 = vpack.c.b16 %v296, %v294
    %v337 = vpack.c.b16 %v299, %v297
    %v338 = vpack.c.b16 %v300, %v298
    %v339 = vpack.c.b16 %v303, %v301
    %v340 = vpack.c.b16 %v304, %v302
    %v341 = vpack.c.b16 %v307, %v305
    %v342 = vpack.c.b16 %v308, %v306
    %v343 = vpack.c.b16 %v311, %v309
    %v344 = vpack.c.b16 %v312, %v310
    %377 = vmatpush.bf16.msra.mxu0 %v327
    %378 = vmatpush.bf16.msra.mxu0 %v325
    %379 = vmatpush.bf16.msra.mxu0 %v323
    %380 = vmatpush.bf16.msra.mxu0 %v321
    %381 = vmatpush.bf16.msra.mxu0 %v319
    %382 = vmatpush.bf16.msra.mxu0 %v317
    %383 = vmatpush.bf16.msra.mxu0 %v315
    %384 = vmatpush.bf16.msra.mxu0 %v313
    %385 = vmatmul.bf16.gmra.mxu0 %v213
    %v386 = vpop.f32.mrf.mxu0
    %v387 = vadd.f32 %v207, %v386
    %v388 = vpop.f32.mrf.mxu0
    %389 = vdwg.mxu0
    %390 = vmatpush.bf16.msra.mxu0 %v343
    %391 = vmatpush.bf16.msra.mxu0 %v341
    %392 = vmatpush.bf16.msra.mxu0 %v339
    %393 = vmatpush.bf16.msra.mxu0 %v337
    %394 = vmatpush.bf16.msra.mxu0 %v335
    %395 = vmatpush.bf16.msra.mxu0 %v333
    %396 = vmatpush.bf16.msra.mxu0 %v331
    %397 = vmatpush.bf16.msra.mxu0 %v329
    %398 = vmatmul.bf16.gmra.mxu0 %v214
    %v399 = vpop.f32.mrf.mxu0
    %v400 = vadd.f32 %v387, %v399
    %v401 = vpop.f32.mrf.mxu0
    %402 = vdwg.mxu0
    %403 = vmatpush.bf16.msra.mxu0 %v328
    %404 = vmatpush.bf16.msra.mxu0 %v326
    %405 = vmatpush.bf16.msra.mxu0 %v324
    %406 = vmatpush.bf16.msra.mxu0 %v322
    %407 = vmatpush.bf16.msra.mxu0 %v320
    %408 = vmatpush.bf16.msra.mxu0 %v318
    %409 = vmatpush.bf16.msra.mxu0 %v316
    %410 = vmatpush.bf16.msra.mxu0 %v314
    %411 = vmatmul.bf16.gmra.mxu0 %v213
    %v412 = vpop.f32.mrf.mxu0
    %v413 = vadd.f32 %v208, %v412
    %v414 = vpop.f32.mrf.mxu0
    %415 = vdwg.mxu0
    %416 = vmatpush.bf16.msra.mxu0 %v344
    %417 = vmatpush.bf16.msra.mxu0 %v342
    %418 = vmatpush.bf16.msra.mxu0 %v340
    %419 = vmatpush.bf16.msra.mxu0 %v338
    %420 = vmatpush.bf16.msra.mxu0 %v336
    %421 = vmatpush.bf16.msra.mxu0 %v334
    %422 = vmatpush.bf16.msra.mxu0 %v332
    %423 = vmatpush.bf16.msra.mxu0 %v330
    %424 = vmatmul.bf16.gmra.mxu0 %v214
    %v425 = vpop.f32.mrf.mxu0
    %v426 = vadd.f32 %v413, %v425
    %v427 = vpop.f32.mrf.mxu0
    %428 = vdwg.mxu0
    %v429 = vmul.f32 %v400, 0.5
    %v430 = vmul.f32 %v426, 0.5
    %v431 = vmul.f32 %v400, 0.044715
    %v432 = vmul.f32 %v426, 0.044715
    %v433 = vmul.f32 %v431, %v400
    %v434 = vmul.f32 %v432, %v426
    %v435 = vmul.f32 %v433, %v400
    %v436 = vmul.f32 %v434, %v426
    %v437 = vadd.f32 %v400, %v435
    %v438 = vadd.f32 %v426, %v436
    %v439 = vmul.f32 %v437, 0.7978846
    %v440 = vmul.f32 %v438, 0.7978846
    %v441 = vtanh.pop %v439
    %v442 = vtanh.pop %v440
    %v443 = vadd.f32 %v441, 1.0
    %v444 = vadd.f32 %v442, 1.0
    %v445 = vmul.f32 %v429, %v443
    %v446 = vmul.f32 %v430, %v444
    %v447 = vpack.c.bf16 %v446, %v445
    %v449 = vrot.slane %v447, 2
    %vm450 = vcmask 1041408
    %v453 = vsel %vm450, %v447, %v449
    %455 = vst [vmem:[#allocation11] sm:$0xf] %v453
    // Predicated region
    $region42: #{tpu_custom_call.1} parent=1 // pred_check
      _
    $region43: #{tpu_custom_call.1} parent=1 // pred_check_branch
      %457 = sbr.rel (0) target = $region45
    $region44: #{tpu_custom_call.1} parent=1 // pred_region
      %459 = vsyncadd [#allocation5], 0
      %s461 = sshll.u32 [#allocation11], 4
      %s462 = int_to_ptr.vmem [resolvable:$true] %s461
      %s463 = sshll.u32 %s5, 4
      %s464 = int_to_ptr.hbm [resolvable:$true] %s463
      %466 = dma.vmem_to_hbm [thread:$0]  %s462, 64, %s464, [#allocation5]
    $region45: #{tpu_custom_call.1} parent=1 // pred_fallthru
      _
    // Predicated region
    $region46: #{tpu_custom_call.1} parent=1 // pred_check
      _
    $region47: #{tpu_custom_call.1} parent=1 // pred_check_branch
      %468 = sbr.rel (0) target = $region49
    $region48: #{tpu_custom_call.1} parent=1 // pred_region
      %470 = dma.done [#allocation5], 64
    $region49: #{tpu_custom_call.1} parent=1 // pred_fallthru
      _
    %471 = vsyncpa [#allocation4], 1
    %472 = vsyncpa [#allocation7], 1
    %473 = vsyncpa [#allocation10], 1
    %474 = vsyncpa [#allocation5], 1

</llo_original>
